<compile_context>
chip_gen: v6e
topology: v6e:2x2x1
jax: 0.10.0
libtpu: 0.0.40
codegen_flags: <defaults>
</compile_context>

<pallas_src>
import functools
import math

import jax
import jax.numpy as jnp
from jax.experimental import pallas as pl
from jax.experimental.pallas import tpu as pltpu

K = 20                      # number of kNN neighbours (module-level constant)


# ---------------------------------------------------------------------------
# Chip-aware defaults: VMEM limit + tile sizes per TPU generation.
# ---------------------------------------------------------------------------
@functools.lru_cache(maxsize=None)
def _chip_defaults():
    vmem_bytes = 64 << 20                       # conservative if query fails
    try:
        vmem_bytes = int(pltpu.get_tpu_info().vmem_capacity_bytes)
    except Exception:
        pass
    if vmem_bytes >= (100 << 20):               # v5e / v6e: 128 MiB VMEM
        return {"vmem_limit": 96 << 20, "tm": 2048, "tn_edge": 512, "tn_row": 1024}
    # v7x: 64 MiB VMEM, 2 TensorCores -> smaller tiles, headroom for 2x buffers
    return {"vmem_limit": 40 << 20, "tm": 1024, "tn_edge": 256, "tn_row": 512}


def _cparams(axes):
    return pltpu.CompilerParams(dimension_semantics=axes,
                                vmem_limit_bytes=_chip_defaults()["vmem_limit"])


def _to_bf16(v):
    return v if v.dtype == jnp.bfloat16 else v.astype(jnp.bfloat16)


def _apply_act(y, act):
    if act == "relu":
        return jnp.maximum(y, 0.0)
    if act == "leakyrelu":
        return jnp.where(y > 0.0, y, 0.2 * y)
    return y


def _mm(x, w):
    """Row-wise matmul.  Tiny contractions (C<=8: the xyz layers) stay on the
    VPU as broadcast-FMAs instead of under-filling the MXU."""
    c = x.shape[-1]
    if c <= 8:
        xf = x.astype(jnp.float32)
        wf = w.astype(jnp.float32)
        acc = xf[:, 0:1] * wf[0:1, :]
        for i in range(1, c):
            acc = acc + xf[:, i:i + 1] * wf[i:i + 1, :]
        return acc
    return jnp.dot(_to_bf16(x), _to_bf16(w), preferred_element_type=jnp.float32)


# ---------------------------------------------------------------------------
# In-kernel neighbour row gather (no (B,k,N,C) HBM tensor).
#   preferred:  jnp.take on the VMEM-resident (N, C) block
#   fallback :  one-hot MXU gather, chunked per neighbour slot (always lowers)
# ---------------------------------------------------------------------------
def _gather_rows(values, idx_2d, use_take):
    """values: (N, C) f32; idx_2d: (nk, tn) int32 -> (nk*tn, C), k-major rows."""
    n_rows = values.shape[0]
    nk, tn = idx_2d.shape
    idx_2d = jnp.clip(idx_2d, 0, n_rows - 1)       # tail tiles carry garbage idx
    if use_take:
        return jnp.take(values, idx_2d.reshape(nk * tn), axis=0, mode="clip")
    iota = jax.lax.broadcasted_iota(jnp.int32, (tn, n_rows), 1)
    vb = _to_bf16(values)
    parts = []
    for j in range(nk):                            # chunked: bounded intermediates
        onehot = (idx_2d[j].reshape(tn, 1) == iota).astype(jnp.bfloat16)
        parts.append(jnp.dot(onehot, vb, preferred_element_type=jnp.float32))
    return jnp.concatenate(parts, axis=0)


@functools.lru_cache(maxsize=None)
def _take_gather_supported():
    """Probe-compile whether Mosaic lowers the jnp.take row gather on this chip."""
    def probe(v_ref, i_ref, o_ref):
        o_ref[...] = _gather_rows(v_ref[...], i_ref[...], True)
    try:
        fn = pl.pallas_call(
            probe, out_shape=jax.ShapeDtypeStruct((20 * 128, 128), jnp.float32))
        jax.jit(fn).lower(jax.ShapeDtypeStruct((1024, 128), jnp.float32),
                          jax.ShapeDtypeStruct((20, 128), jnp.int32)).compile()
        return True
    except Exception:
        return False


# ---------------------------------------------------------------------------
# Kernel 1: fused  Y = act( X @ W + b )     (BN scale already folded into W)
# ---------------------------------------------------------------------------
def _linear_kernel(x_ref, w_ref, b_ref, o_ref, *, act):
    y = jnp.dot(_to_bf16(x_ref[...]), _to_bf16(w_ref[...]),
                preferred_element_type=jnp.float32)
    o_ref[...] = _apply_act(y + b_ref[...], act)


def fused_linear(x, w, shift, act="none", *, tm=None):
    """x: (M, Kd), w: (Kd, Nd) bf16, shift: (Nd,) f32 -> (M, Nd) f32."""
    M, Kd = x.shape
    Nd = w.shape[1]
    TM = min(tm or _chip_defaults()["tm"], M)
    b2 = shift.reshape(1, Nd).astype(jnp.float32)
    return pl.pallas_call(
        functools.partial(_linear_kernel, act=act),
        out_shape=jax.ShapeDtypeStruct((M, Nd), jnp.float32),
        grid=(pl.cdiv(M, TM),),
        in_specs=[
            pl.BlockSpec((TM, Kd), lambda i: (i, 0)),
            pl.BlockSpec((Kd, Nd), lambda i: (0, 0)),
            pl.BlockSpec((1, Nd), lambda i: (0, 0)),
        ],
        out_specs=pl.BlockSpec((TM, Nd), lambda i: (i, 0)),
        compiler_params=_cparams(("parallel",)),
    )(x, w, b2)


# ---------------------------------------------------------------------------
# Kernel 2: fused edge conv with in-kernel gather:
#   out[n] = lrelu( max_j( x[idx[n,j]] @ Wt ) + x[n] @ Wc + b )
# (activation after the max is valid: monotone act + per-channel const shift)
# ---------------------------------------------------------------------------
def _edge_conv_kernel(xfull_ref, idx_ref, xcen_ref, wt_ref, wc_ref, b_ref, o_ref,
                      *, use_take):
    _, nk, tn = idx_ref.shape
    neigh = _gather_rows(xfull_ref[0], idx_ref[0], use_take)     # (nk*tn, C)
    y = _mm(neigh, wt_ref[...])                                  # single MXU call
    cout = y.shape[-1]
    m = jnp.max(y.reshape(nk, tn, cout), axis=0)                 # max over k
    cen = _mm(xcen_ref[0], wc_ref[...])                          # centre term
    z = m + cen + b_ref[...]
    o_ref[0] = jnp.where(z > 0.0, z, 0.2 * z).astype(o_ref.dtype)


def edge_conv_max(x_bnc, idx_bkn, wt, wc, shift, *, tn, use_take,
                  out_dtype=jnp.float32):
    B, N, C = x_bnc.shape
    nk = idx_bkn.shape[1]
    Cout = wt.shape[1]
    TN = min(tn, N)
    take = bool(use_take) and C > 8          # xyz layers use the VPU/one-hot path
    b2 = shift.reshape(1, Cout).astype(jnp.float32)
    return pl.pallas_call(
        functools.partial(_edge_conv_kernel, use_take=take),
        out_shape=jax.ShapeDtypeStruct((B, N, Cout), out_dtype),
        grid=(B, pl.cdiv(N, TN)),
        in_specs=[
            pl.BlockSpec((1, N, C), lambda b, i: (b, 0, 0)),     # resident per batch
            pl.BlockSpec((1, nk, TN), lambda b, i: (b, 0, i)),
            pl.BlockSpec((1, TN, C), lambda b, i: (b, i, 0)),
            pl.BlockSpec((C, Cout), lambda b, i: (0, 0)),
            pl.BlockSpec((C, Cout), lambda b, i: (0, 0)),
            pl.BlockSpec((1, Cout), lambda b, i: (0, 0)),
        ],
        out_specs=pl.BlockSpec((1, TN, Cout), lambda b, i: (b, i, 0)),
        compiler_params=_cparams(("parallel", "parallel")),
    )(x_bnc, idx_bkn, x_bnc, wt, wc, b2)


# ---------------------------------------------------------------------------
# Kernel 3: transform-net fused conv1 (6->64) + conv2 (64->128) + max over k
#           (in-kernel gather; conv1 act applied per neighbour = exact)
# ---------------------------------------------------------------------------
def _tnet_edge_kernel(xfull_ref, idx_ref, xcen_ref, w1t_ref, w1c_ref, b1_ref,
                      w2_ref, b2_ref, o_ref):
    _, nk, tn = idx_ref.shape
    c1 = w1t_ref.shape[1]
    c2 = w2_ref.shape[1]
    neigh = _gather_rows(xfull_ref[0], idx_ref[0], False)        # (nk*tn, 3)
    h1 = _mm(neigh, w1t_ref[...])                                # VPU (C=3)
    cen = _mm(xcen_ref[0], w1c_ref[...]) + b1_ref[...]           # (tn, 64)
    h1 = h1.reshape(nk, tn, c1) + cen[None]
    h1 = jnp.where(h1 > 0.0, h1, 0.2 * h1)                       # conv1 leakyrelu
    h2 = jnp.dot(h1.reshape(nk * tn, c1).astype(jnp.bfloat16),
                 _to_bf16(w2_ref[...]), preferred_element_type=jnp.float32)
    m = jnp.max(h2.reshape(nk, tn, c2), axis=0) + b2_ref[...]
    o_ref[0] = jnp.where(m > 0.0, m, 0.2 * m)                    # conv2 act (after max)


def tnet_edge_conv(x_bnc, idx_bkn, w1t, w1c, b1, w2, b2, *, tn):
    B, N, C = x_bnc.shape
    nk = idx_bkn.shape[1]
    C1 = w1t.shape[1]
    C2 = w2.shape[1]
    TN = min(tn, N)
    b1r = b1.reshape(1, C1).astype(jnp.float32)
    b2r = b2.reshape(1, C2).astype(jnp.float32)
    return pl.pallas_call(
        _tnet_edge_kernel,
        out_shape=jax.ShapeDtypeStruct((B, N, C2), jnp.float32),
        grid=(B, pl.cdiv(N, TN)),
        in_specs=[
            pl.BlockSpec((1, N, C), lambda b, i: (b, 0, 0)),
            pl.BlockSpec((1, nk, TN), lambda b, i: (b, 0, i)),
            pl.BlockSpec((1, TN, C), lambda b, i: (b, i, 0)),
            pl.BlockSpec((C, C1), lambda b, i: (0, 0)),
            pl.BlockSpec((C, C1), lambda b, i: (0, 0)),
            pl.BlockSpec((1, C1), lambda b, i: (0, 0)),
            pl.BlockSpec((C1, C2), lambda b, i: (0, 0)),
            pl.BlockSpec((1, C2), lambda b, i: (0, 0)),
        ],
        out_specs=pl.BlockSpec((1, TN, C2), lambda b, i: (b, i, 0)),
        compiler_params=_cparams(("parallel", "parallel")),
    )(x_bnc, idx_bkn, x_bnc, w1t, w1c, b1r, w2, b2r)


# ---------------------------------------------------------------------------
# Kernel 4: linear + max over points, N-tiled with a (1,Cout) accumulator
#   (transform-net conv3+max and conv5+adaptive_max_pool1d).
# ---------------------------------------------------------------------------
def _linear_rowmax_kernel(x_ref, w_ref, b_ref, o_ref, acc_ref, *, act, n_total,
                          needs_mask):
    i = pl.program_id(1)
    tn = x_ref.shape[1]
    y = jnp.dot(_to_bf16(x_ref[0]), _to_bf16(w_ref[...]),
                preferred_element_type=jnp.float32)              # (TN, Cout)
    if needs_mask:
        rows = jax.lax.broadcasted_iota(jnp.int32, (tn, 1), 0) + i * tn
        y = jnp.where(rows < n_total, y, -jnp.inf)
    m = jnp.max(y, axis=0, keepdims=True)                        # (1, Cout)

    @pl.when(i == 0)
    def _():
        acc_ref[...] = m

    @pl.when(i > 0)
    def _():
        acc_ref[...] = jnp.maximum(acc_ref[...], m)

    @pl.when(i == pl.num_programs(1) - 1)
    def _():
        o_ref[0] = _apply_act(acc_ref[...] + b_ref[...], act)    # max-then-act valid


def linear_rowmax(x_bnc, w, shift, act="leakyrelu", *, tn):
    B, N, C = x_bnc.shape
    Cout = w.shape[1]
    TN = min(tn, N)
    b2 = shift.reshape(1, Cout).astype(jnp.float32)
    out = pl.pallas_call(
        functools.partial(_linear_rowmax_kernel, act=act, n_total=N,
                          needs_mask=(N % TN) != 0),
        out_shape=jax.ShapeDtypeStruct((B, 1, Cout), jnp.float32),
        grid=(B, pl.cdiv(N, TN)),
        in_specs=[
            pl.BlockSpec((1, TN, C), lambda b, i: (b, i, 0)),
            pl.BlockSpec((C, Cout), lambda b, i: (0, 0)),
            pl.BlockSpec((1, Cout), lambda b, i: (0, 0)),
        ],
        out_specs=pl.BlockSpec((1, 1, Cout), lambda b, i: (b, 0, 0)),
        scratch_shapes=[pltpu.VMEM((1, Cout), jnp.float32)],
        compiler_params=_cparams(("parallel", "arbitrary")),
    )(x_bnc, w, b2)
    return out[:, 0, :]                                          # (B, Cout)


# ---------------------------------------------------------------------------
# Kernel 5: kNN scores  s[b,i,j] = 2<x_i, x_j> - |x_j|^2
#   (the per-row constant -|x_i|^2 does not change the per-row top-k ordering)
# ---------------------------------------------------------------------------
def _pdist_kernel(xr_ref, xf_ref, sq_ref, o_ref):
    inner = jax.lax.dot_general(xr_ref[0], xf_ref[0], (((1,), (1,)), ((), ())),
                                preferred_element_type=jnp.float32)   # (TN, N)
    o_ref[0] = 2.0 * inner - sq_ref[0]


def pairwise_knn_scores(x_bnc, tn=512):
    B, N, C = x_bnc.shape
    TN = min(tn, N)
    x32 = x_bnc.astype(jnp.float32)                 # f32: top-k precision
    sq = jnp.sum(x32 * x32, axis=-1, keepdims=True).reshape(B, 1, N)
    return pl.pallas_call(
        _pdist_kernel,
        out_shape=jax.ShapeDtypeStruct((B, N, N), jnp.float32),
        grid=(B, pl.cdiv(N, TN)),
        in_specs=[
            pl.BlockSpec((1, TN, C), lambda b, i: (b, i, 0)),
            pl.BlockSpec((1, N, C), lambda b, i: (b, 0, 0)),
            pl.BlockSpec((1, 1, N), lambda b, i: (b, 0, 0)),
        ],
        out_specs=pl.BlockSpec((1, TN, N), lambda b, i: (b, i, 0)),
        compiler_params=_cparams(("parallel", "parallel")),
    )(x32, x32, sq)


def knn_indices(x_bnc, k, approx=False):
    """Returns neighbour indices (B, k, N) int32."""
    scores = pairwise_knn_scores(x_bnc)
    if approx:
        # TODO(synk): approximate kNN; gate behind an end-to-end accuracy check.
        _, idx = jax.lax.approx_max_k(scores, k, recall_target=0.95)
    else:
        _, idx = jax.lax.top_k(scores, k)
    return jnp.swapaxes(idx, 1, 2).astype(jnp.int32)


# ---------------------------------------------------------------------------
# Kernel 6: fused aux-heads first layer (multi-output, no (B,N,1536) concat):
#   h_head = relu( x_cat @ W_head[:512] + (x5 @ W_head[512:] + b_head) )
# ---------------------------------------------------------------------------
def _aux_heads_kernel(xcat_ref, w_ref, t_ref, *o_refs, widths):
    y = jnp.dot(_to_bf16(xcat_ref[0]), _to_bf16(w_ref[...]),
                preferred_element_type=jnp.float32) + t_ref[0]
    y = jnp.maximum(y, 0.0)
    off = 0
    for o_ref, w in zip(o_refs, widths):
        o_ref[0] = y[:, off:off + w]
        off += w


def aux_first_layers(x_cat, per_batch, w_top, widths, *, tn):
    B, N, Cin = x_cat.shape
    total = int(sum(widths))
    TN = min(tn, N)
    outs = pl.pallas_call(
        functools.partial(_aux_heads_kernel, widths=tuple(widths)),
        out_shape=tuple(jax.ShapeDtypeStruct((B, N, w), jnp.float32)
                        for w in widths),
        grid=(B, pl.cdiv(N, TN)),
        in_specs=[
            pl.BlockSpec((1, TN, Cin), lambda b, i: (b, i, 0)),
            pl.BlockSpec((Cin, total), lambda b, i: (0, 0)),
            pl.BlockSpec((1, 1, total), lambda b, i: (b, 0, 0)),
        ],
        out_specs=tuple(pl.BlockSpec((1, TN, w), lambda b, i: (b, i, 0))
                        for w in widths),
        compiler_params=_cparams(("parallel", "parallel")),
    )(x_cat, w_top, per_batch)
    return [o.reshape(B * N, o.shape[-1]) for o in outs]


# ---------------------------------------------------------------------------
# Edge-conv helpers
# ---------------------------------------------------------------------------
def _split_edge_weights(w, c_in):
    """w: (2C, Cout) with [neigh-centre | centre] halves -> (W_top, W_centre)."""
    wt = w[:c_in]
    wc = (w[c_in:].astype(jnp.float32) - w[:c_in].astype(jnp.float32)
          ).astype(jnp.bfloat16)
    return wt, wc


def edge_conv(p, name, feats, k, cfg, use_take, approx_knn,
              out_dtype=jnp.float32):
    idx = knn_indices(feats, k, approx=approx_knn)
    wt, wc = _split_edge_weights(p[name]["w"], feats.shape[-1])
    return edge_conv_max(feats, idx, wt, wc, p[name]["t"],
                         tn=cfg["tn_edge"], use_take=use_take,
                         out_dtype=out_dtype)


# ---------------------------------------------------------------------------
# Parameters (deterministic synthetic weights; BN folded for eval, bf16 MXU)
# ---------------------------------------------------------------------------
def make_layer(key, cin, cout, *, bias=False, bn=True):
    k1, k2, k3, k4, k5, k6 = jax.random.split(key, 6)
    w = jax.random.normal(k1, (cin, cout), jnp.float32) * (1.0 / math.sqrt(cin))
    b = (jax.random.normal(k2, (cout,), jnp.float32) * 0.05
         if bias else jnp.zeros((cout,), jnp.float32))
    if bn:
        gamma = 1.0 + 0.1 * jax.random.normal(k3, (cout,), jnp.float32)
        beta = 0.1 * jax.random.normal(k4, (cout,), jnp.float32)
        mean = 0.1 * jax.random.normal(k5, (cout,), jnp.float32)
        var = 1.0 + 0.5 * jax.random.uniform(k6, (cout,), jnp.float32)
        s = gamma / jnp.sqrt(var + 1e-5)
        t = (b - mean) * s + beta
    else:
        s = jnp.ones((cout,), jnp.float32)
        t = b
    return {"w": (w * s[None, :]).astype(jnp.bfloat16),
            "t": t.astype(jnp.float32)}


def init_params(key, num_class=10, density_num_class=10, pergroup=0.05):
    specs = [
        # transform_net(6 -> 3)
        ("t_c1", 6, 64, dict(bn=True)),
        ("t_c2", 64, 128, dict(bn=True)),
        ("t_c3", 128, 1024, dict(bn=True)),
        ("t_f1", 1024, 512, dict(bn=True, bias=False)),
        ("t_f2", 512, 256, dict(bn=True, bias=True)),
        ("t_f3", 256, 9, dict(bn=False, bias=True)),
        # DGCNN edge convs + conv5
        ("c1", 6, 64, dict(bn=True)),
        ("c2", 128, 64, dict(bn=True)),
        ("c3", 128, 128, dict(bn=True)),
        ("c4", 256, 256, dict(bn=True)),
        ("c5", 512, 1024, dict(bn=True)),
        # classifier
        ("cls_m1", 1024, 512, dict(bn=True, bias=True)),
        ("cls_m2", 512, 256, dict(bn=True, bias=True)),
        ("cls_m3", 256, num_class, dict(bn=False, bias=True)),
    ]
    for pre in ("def", "nrm", "scan"):   # DefRec / Normal_prediction / Rec_scan
        specs += [
            (pre + "1", 1536, 256, dict(bn=True)),
            (pre + "2", 256, 256, dict(bn=True)),
            (pre + "3", 256, 128, dict(bn=True)),
            (pre + "4", 128, 3, dict(bn=False, bias=False)),
        ]
    specs += [  # Density_prediction
        ("den1", 1536, 512, dict(bn=True)),
        ("den_m1", 512, 256, dict(bn=True, bias=True)),
        ("den_m2", 256, 256, dict(bn=True, bias=True)),
        ("den_m3", 256, density_num_class, dict(bn=False, bias=True)),
    ]
    keys = jax.random.split(key, len(specs))
    p = {n: make_layer(kk, ci, co, **kw) for (n, ci, co, kw), kk in zip(specs, keys)}
    # fc2: frozen weights  w[0, i] = pergroup * i  (Linear(num_class, 1, bias=False))
    p["den_fc2"] = {
        "w": (pergroup * jnp.arange(density_num_class, dtype=jnp.float32)
              ).reshape(density_num_class, 1),
        "t": jnp.zeros((1,), jnp.float32),
    }
    return p


def tiny_layer(layer, x):
    """Narrow-output (<16 lanes) layers run in plain JAX (lane-dense concern)."""
    return x.astype(jnp.float32) @ layer["w"].astype(jnp.float32) + layer["t"]


# ---------------------------------------------------------------------------
# Sub-networks
# ---------------------------------------------------------------------------
def transform_net_fwd(p, x_bnc, k, cfg, approx_knn):     # (B, N, 3) -> (B, 3, 3)
    B, N, C = x_bnc.shape
    idx = knn_indices(x_bnc, k, approx=approx_knn)
    w1t, w1c = _split_edge_weights(p["t_c1"]["w"], C)
    h2 = tnet_edge_conv(x_bnc, idx, w1t, w1c, p["t_c1"]["t"],
                        p["t_c2"]["w"], p["t_c2"]["t"], tn=cfg["tn_edge"])
    h3 = linear_rowmax(h2, p["t_c3"]["w"], p["t_c3"]["t"], "leakyrelu",
                       tn=cfg["tn_row"])                 # (B, 1024)
    h = fused_linear(h3, p["t_f1"]["w"], p["t_f1"]["t"], "leakyrelu", tm=cfg["tm"])
    h = fused_linear(h, p["t_f2"]["w"], p["t_f2"]["t"], "leakyrelu", tm=cfg["tm"])
    h = tiny_layer(p["t_f3"], h)                         # (B, 9) tiny
    h = h + jnp.eye(3, dtype=jnp.float32).reshape(1, 9)
    return h.reshape(B, 3, 3)


def region_head_rest(p, prefix, h1, B, N, tm):           # h1: (B*N, 256) -> (B, N, 3)
    h = fused_linear(h1, p[prefix + "2"]["w"], p[prefix + "2"]["t"], "relu", tm=tm)
    h = fused_linear(h, p[prefix + "3"]["w"], p[prefix + "3"]["t"], "relu", tm=tm)
    return tiny_layer(p[prefix + "4"], h).reshape(B, N, 3)


def density_head_rest(p, h1, tm):                        # h1: (B*N, 512)
    h = fused_linear(h1, p["den_m1"]["w"], p["den_m1"]["t"], "leakyrelu", tm=tm)
    h = fused_linear(h, p["den_m2"]["w"], p["den_m2"]["t"], "leakyrelu", tm=tm)
    logits = tiny_layer(p["den_m3"], h)
    p_vec = jax.nn.softmax(logits, axis=1)
    density = p_vec @ p["den_fc2"]["w"]
    return p_vec, density[:, 0]


# ---------------------------------------------------------------------------
# Full DGCNN forward
# ---------------------------------------------------------------------------
def dgcnn_forward(p, x, *, k=K, activate_DefRec=False, activate_normal=False,
                  activate_scan=False, activate_density=False, approx_knn=False):
    # x: (B, 3, N) to match the PyTorch calling convention
    cfg = _chip_defaults()
    use_take = _take_gather_supported()
    B, _, N = x.shape
    xb = jnp.transpose(x, (0, 2, 1)).astype(jnp.float32)        # (B, N, 3)

    T = transform_net_fwd(p, xb, k, cfg, approx_knn)            # (B, 3, 3)
    # torch.matmul(T, x) on (B,3,N)  ==  xb @ T^T in channels-last (tiny; glue)
    xb = jnp.einsum("bnc,bdc->bnd", xb, T)

    x1 = edge_conv(p, "c1", xb, k, cfg, use_take, approx_knn)               # (B,N,64)
    x2 = edge_conv(p, "c2", x1, k, cfg, use_take, approx_knn)               # (B,N,64)
    x3 = edge_conv(p, "c3", x2, k, cfg, use_take, approx_knn)               # (B,N,128)
    x4 = edge_conv(p, "c4", x3, k, cfg, use_take, approx_knn,
                   out_dtype=jnp.bfloat16)                                  # (B,N,256)

    # x_cat in bf16 (both consumers cast to bf16 in-kernel); x1..x3 stay f32
    # because they feed the f32 kNN distances.
    x_cat = jnp.concatenate([x1.astype(jnp.bfloat16), x2.astype(jnp.bfloat16),
                             x3.astype(jnp.bfloat16), x4], axis=-1)         # (B,N,512)
    # conv5 + BN + leakyrelu + adaptive_max_pool1d, N-tiled accumulator
    x5 = linear_rowmax(x_cat, p["c5"]["w"], p["c5"]["t"], "leakyrelu",
                       tn=cfg["tn_row"])                                    # (B,1024)

    logits = {}
    h = fused_linear(x5, p["cls_m1"]["w"], p["cls_m1"]["t"], "leakyrelu", tm=cfg["tm"])
    h = fused_linear(h, p["cls_m2"]["w"], p["cls_m2"]["t"], "leakyrelu", tm=cfg["tm"])
    logits["cls"] = tiny_layer(p["cls_m3"], h)                              # (B, ncls)

    head_specs = []
    if activate_DefRec:
        head_specs.append(("DefRec", "def"))
    if activate_normal:
        head_specs.append(("Normal", "nrm"))
    if activate_scan:
        head_specs.append(("Rec_scan", "scan"))
    if activate_density:
        head_specs.append(("density", "den"))

    if head_specs:
        nf = x_cat.shape[-1]                                     # 512
        first = [pfx + "1" for _, pfx in head_specs]
        widths = [int(p[n]["w"].shape[1]) for n in first]
        # split each 1536-wide head weight at row 512: x_cat part + x5 part
        w_top = jnp.concatenate([p[n]["w"][:nf] for n in first], axis=1)    # (512, tot)
        w_bot = jnp.concatenate([p[n]["w"][nf:] for n in first],
                                axis=1).astype(jnp.float32)                 # (1024, tot)
        t_all = jnp.concatenate([p[n]["t"] for n in first], axis=0)
        per_batch = (x5 @ w_bot + t_all).reshape(B, 1, -1)                  # (B,1,tot)
        parts = aux_first_layers(x_cat, per_batch, w_top, widths, tn=cfg["tn_row"])

        for (out_name, pfx), h1 in zip(head_specs, parts):
            if pfx == "den":
                pv, dn = density_head_rest(p, h1, cfg["tm"])
                logits["density"] = pv                                      # (B*N, ncls)
                logits["density_mse"] = dn                                  # (B*N,)
            else:
                logits[out_name] = region_head_rest(p, pfx, h1, B, N, cfg["tm"])
    # TODO(synk): BatchNorm is evaluated in inference (running-stats) mode and
    # Dropout is identity; train-mode batch statistics are not reproduced.
    return logits


# ---------------------------------------------------------------------------
if __name__ == "__main__":
    B, N = 2, 32  # N must be >= K (=20) neighbours
    x = jax.random.normal(jax.random.PRNGKey(0), (B, 3, N), jnp.float32)
    params = init_params(jax.random.PRNGKey(42), num_class=10,
                         density_num_class=10, pergroup=0.05)

    logits = dgcnn_forward(
        params, x,
        activate_DefRec=True, activate_normal=True,
        activate_scan=True, activate_density=True)
    jax.block_until_ready(logits)

    assert logits["cls"].shape == (B, 10)
    assert logits["DefRec"].shape == (B, N, 3)
    assert logits["Normal"].shape == (B, N, 3)
    assert logits["Rec_scan"].shape == (B, N, 3)
    assert logits["density"].shape == (B * N, 10)
    assert logits["density_mse"].shape == (B * N,)
    print("KERNEL_OK")
</pallas_src>

<mosaic_0001>
module attributes {stable_mosaic.version = 11 : i64} {
  func.func @_pdist_kernel(%arg0: i32, %arg1: i32, %arg2: memref<1x32x3xf32, #tpu.memory_space<vmem>>, %arg3: memref<1x32x3xf32, #tpu.memory_space<vmem>>, %arg4: memref<1x1x32xf32, #tpu.memory_space<vmem>>, %arg5: memref<1x32x32xf32, #tpu.memory_space<vmem>>) attributes {dimension_semantics = [#tpu.dimension_semantics<parallel>, #tpu.dimension_semantics<parallel>], iteration_bounds = array<i64: 2, 1>, scalar_prefetch = 0 : i64, scratch_operands = 0 : i64, tpu.core_type = #tpu.core_type<tc>, window_params = [{transform_indices = @transform_0, window_bounds = array<i64: 1, 32, 3>}, {transform_indices = @transform_1, window_bounds = array<i64: 1, 32, 3>}, {transform_indices = @transform_2, window_bounds = array<i64: 1, 1, 32>}, {transform_indices = @transform_3, window_bounds = array<i64: 1, 32, 32>}]} {
    %c0 = arith.constant 0 : index
    %c0_0 = arith.constant 0 : index
    %c0_1 = arith.constant 0 : index
    %0 = vector.load %arg2[%c0, %c0_0, %c0_1] : memref<1x32x3xf32, #tpu.memory_space<vmem>>, vector<1x32x3xf32>
    %1 = vector.shape_cast %0 : vector<1x32x3xf32> to vector<32x3xf32>
    %c0_2 = arith.constant 0 : index
    %c0_3 = arith.constant 0 : index
    %c0_4 = arith.constant 0 : index
    %2 = vector.load %arg3[%c0_2, %c0_3, %c0_4] : memref<1x32x3xf32, #tpu.memory_space<vmem>>, vector<1x32x3xf32>
    %3 = vector.shape_cast %2 : vector<1x32x3xf32> to vector<32x3xf32>
    %cst = arith.constant dense<0.000000e+00> : vector<32x32xf32>
    %4 = tpu.matmul %1, %3, %cst {dimension_numbers = #tpu.dot_dimension_numbers<[1], [1], [0], [0], [0, 0, 1, 0], [], []>} : vector<32x3xf32>, vector<32x3xf32>, vector<32x32xf32> -> vector<32x32xf32>
    %cst_5 = arith.constant 2.000000e+00 : f32
    %5 = vector.broadcast %cst_5 : f32 to vector<32x32xf32>
    %6 = arith.mulf %5, %4 : vector<32x32xf32>
    %c0_6 = arith.constant 0 : index
    %c0_7 = arith.constant 0 : index
    %c0_8 = arith.constant 0 : index
    %7 = vector.load %arg4[%c0_6, %c0_7, %c0_8] : memref<1x1x32xf32, #tpu.memory_space<vmem>>, vector<1x1x32xf32>
    %8 = vector.shape_cast %7 : vector<1x1x32xf32> to vector<1x32xf32>
    %9 = vector.broadcast %8 : vector<1x32xf32> to vector<32x32xf32>
    %10 = arith.subf %6, %9 : vector<32x32xf32>
    %c0_9 = arith.constant 0 : index
    %c0_10 = arith.constant 0 : index
    %c0_11 = arith.constant 0 : index
    %11 = vector.load %arg5[%c0_9, %c0_10, %c0_11] : memref<1x32x32xf32, #tpu.memory_space<vmem>>, vector<1x32x32xf32>
    %12 = vector.shape_cast %11 : vector<1x32x32xf32> to vector<32x32xf32>
    %13 = vector.shape_cast %10 : vector<32x32xf32> to vector<1x32x32xf32>
    tpu.vector_store %arg5[%c0_9, %c0_10, %c0_11], %13 {strides = array<i32>} : memref<1x32x32xf32, #tpu.memory_space<vmem>>, vector<1x32x32xf32>,
    return
  }
  func.func @transform_0(%arg0: i32, %arg1: i32) -> (i32, i32, i32) {
    %c0_i32 = arith.constant 0 : i32
    %c0_i32_0 = arith.constant 0 : i32
    return %arg0, %arg1, %c0_i32 : i32, i32, i32
  }
  func.func @transform_1(%arg0: i32, %arg1: i32) -> (i32, i32, i32) {
    %c0_i32 = arith.constant 0 : i32
    %c0_i32_0 = arith.constant 0 : i32
    %c0_i32_1 = arith.constant 0 : i32
    return %arg0, %c0_i32, %c0_i32_0 : i32, i32, i32
  }
  func.func @transform_2(%arg0: i32, %arg1: i32) -> (i32, i32, i32) {
    %c0_i32 = arith.constant 0 : i32
    %c0_i32_0 = arith.constant 0 : i32
    %c0_i32_1 = arith.constant 0 : i32
    return %arg0, %c0_i32, %c0_i32_0 : i32, i32, i32
  }
  func.func @transform_3(%arg0: i32, %arg1: i32) -> (i32, i32, i32) {
    %c0_i32 = arith.constant 0 : i32
    %c0_i32_0 = arith.constant 0 : i32
    return %arg0, %arg1, %c0_i32 : i32, i32, i32
  }
}

</mosaic_0001>

<llo_original>
// kernel: tpu_custom_call.1
$region0: #{tpu_custom_call.1}
  #allocation0 [shape = 'u32[]', space=smem, size = 0x4, offset = 0x4, fixed_abs, tag = 'smem constant byte address 0x4 - core index']
  #allocation1 [shape = 'u32[144,128]{1,0:T(1,128)}', space=vmem, size = 0x12000, scoped, tag = 'internal scratch']
  %s0 = inlined_call_operand.vmem [shape: f32[2,32,3], index: 0, kind: input, shape index: {}]
  %s1 = inlined_call_operand.vmem [shape: f32[2,32,3], index: 1, kind: input, shape index: {}]
  %s2 = inlined_call_operand.vmem [shape: f32[2,1,32], index: 2, kind: input, shape index: {}]
  %s3 = inlined_call_operand.hbm [shape: f32[2,32,32], index: 3, kind: output, shape index: {}]
  %s4 = sld [smem:[#allocation0]]
  $region45: #{tpu_custom_call.1} parent=0
    _
  %s6 = ssub.s32 1, %s4
  %s7 = scalar_select 0, %s6, %s4
  $region1: #{tpu_custom_call.1} parent=0
    #allocation2 [shape = 'u8[32768]{0}', space=vmem, size = 0x8000, scoped, tag = 'output window, operand 0']
    #allocation3 [shape = 's32[2]{0}', space=sflag, size = 0x8, scoped, tag = 'scoped memory for tpu_custom_call.1']
    %8 = vsyncpa [#allocation3], 0
    %s9 = scalar_lea.sflag [#allocation3], 1
    %10 = vsyncpa %s9, 0
    loop: start=0, step=1, limit=4
    $region2: #{tpu_custom_call.1} parent=1 // loop_pre_header
      _
    $region3: #{tpu_custom_call.1} parent=1 // loop_header
      %s12 = sphi 0, %s16
      %p13 = scmp.ge.s32.totalorder %s12, 4
      %s19 = sphi 0, %s31
      %s20 = sphi 0, %s27
      %s21 = sphi 0, %s19
      %s22 = sphi 0, %s20
      %s23 = sphi 0, %s21
      %s24 = sphi 0, %s22
      %s36 = sphi 0, %s38
      %s39 = sphi 0, %s36
      %s40 = sphi 0, %s39
      %s56 = sphi 0, %s40
      %s62 = sphi 0, %s64
      %s65 = sphi 0, %s62
      %s66 = sphi 0, %s65
      %s82 = sphi 0, %s66
      %s88 = sphi 0, %s90
      %s91 = sphi 0, %s88
      %s92 = sphi 0, %s91
      %s108 = sphi 0, %s92
      %s116 = sphi 0, %s118
      %s119 = sphi 0, %s116
      %s120 = sphi 0, %s119
      %s136 = sphi 0, %s120
    $region4: #{tpu_custom_call.1} parent=1 // loop_header_branch
      %15 = sbr.rel (%p13) target = $region8
    $region5: #{tpu_custom_call.1} parent=1 // loop_body
      %s17 = ssub.s32 %s12, 1
      %s18 = ssub.s32 %s12, 2
      %s25 = sadd.s32 1, %s20
      %p26 = scmp.ge.s32.totalorder %s25, 1
      %s27 = scalar_select %p26, 0, %s25
      %s28 = sadd.s32 1, %s19
      %s29 = scalar_select %p26, %s28, %s19
      %p30 = scmp.ge.s32.totalorder %s29, 2
      %s31 = scalar_select %p30, 0, %s29
      %s32 = ssub.s32 %s19, %s31
      %s33 = ssub.s32 %s20, %s27
      %s34 = sor.u32 %s32, %s33
      %p35 = scmp.eq.s32.totalorder %s34, 0
      %s37 = sadd.s32 %s36, 1
      %s38 = scalar_select %p35, %s36, %s37
      %p41 = pneg %p35
      %p42 = scmp.eq.s32.totalorder %s12, 1
      %p43 = por %p41, %p42
      %p44 = scmp.ne.s32.totalorder %s36, %s39
      %p45 = scmp.eq.s32.totalorder %s12, 0
      %p46 = por %p44, %p45
      %p47 = scmp.ne.s32.totalorder %s36, %s39
      %p48 = scmp.eq.s32.totalorder %s17, 1
      %p49 = por %p47, %p48
      %p50 = scmp.ne.s32.totalorder %s39, %s40
      %p51 = scmp.eq.s32.totalorder %s17, 0
      %p52 = por %p50, %p51
      %p53 = scmp.ne.s32.totalorder %s39, %s40
      %p54 = scmp.eq.s32.totalorder %s18, 1
      %p55 = por %p53, %p54
      %p57 = scmp.ne.s32.totalorder %s40, %s56
      %p58 = scmp.eq.s32.totalorder %s18, 0
      %p59 = por %p57, %p58
      %s60 = ssub.s32 %s19, %s31
      %p61 = scmp.eq.s32.totalorder %s60, 0
      %s63 = sadd.s32 %s62, 1
      %s64 = scalar_select %p61, %s62, %s63
      %p67 = pneg %p61
      %p68 = scmp.eq.s32.totalorder %s12, 1
      %p69 = por %p67, %p68
      %p70 = scmp.ne.s32.totalorder %s62, %s65
      %p71 = scmp.eq.s32.totalorder %s12, 0
      %p72 = por %p70, %p71
      %p73 = scmp.ne.s32.totalorder %s62, %s65
      %p74 = scmp.eq.s32.totalorder %s17, 1
      %p75 = por %p73, %p74
      %p76 = scmp.ne.s32.totalorder %s65, %s66
      %p77 = scmp.eq.s32.totalorder %s17, 0
      %p78 = por %p76, %p77
      %p79 = scmp.ne.s32.totalorder %s65, %s66
      %p80 = scmp.eq.s32.totalorder %s18, 1
      %p81 = por %p79, %p80
      %p83 = scmp.ne.s32.totalorder %s66, %s82
      %p84 = scmp.eq.s32.totalorder %s18, 0
      %p85 = por %p83, %p84
      %s86 = ssub.s32 %s19, %s31
      %p87 = scmp.eq.s32.totalorder %s86, 0
      %s89 = sadd.s32 %s88, 1
      %s90 = scalar_select %p87, %s88, %s89
      %p93 = pneg %p87
      %p94 = scmp.eq.s32.totalorder %s12, 1
      %p95 = por %p93, %p94
      %p96 = scmp.ne.s32.totalorder %s88, %s91
      %p97 = scmp.eq.s32.totalorder %s12, 0
      %p98 = por %p96, %p97
      %p99 = scmp.ne.s32.totalorder %s88, %s91
      %p100 = scmp.eq.s32.totalorder %s17, 1
      %p101 = por %p99, %p100
      %p102 = scmp.ne.s32.totalorder %s91, %s92
      %p103 = scmp.eq.s32.totalorder %s17, 0
      %p104 = por %p102, %p103
      %p105 = scmp.ne.s32.totalorder %s91, %s92
      %p106 = scmp.eq.s32.totalorder %s18, 1
      %p107 = por %p105, %p106
      %p109 = scmp.ne.s32.totalorder %s92, %s108
      %p110 = scmp.eq.s32.totalorder %s18, 0
      %p111 = por %p109, %p110
      %s112 = ssub.s32 %s19, %s31
      %s113 = ssub.s32 %s20, %s27
      %s114 = sor.u32 %s112, %s113
      %p115 = scmp.eq.s32.totalorder %s114, 0
      %s117 = sadd.s32 %s116, 1
      %s118 = scalar_select %p115, %s116, %s117
      %p121 = pneg %p115
      %p122 = scmp.eq.s32.totalorder %s12, 1
      %p123 = por %p121, %p122
      %p124 = scmp.ne.s32.totalorder %s116, %s119
      %p125 = scmp.eq.s32.totalorder %s12, 0
      %p126 = por %p124, %p125
      %p127 = scmp.ne.s32.totalorder %s116, %s119
      %p128 = scmp.eq.s32.totalorder %s17, 1
      %p129 = por %p127, %p128
      %p130 = scmp.ne.s32.totalorder %s119, %s120
      %p131 = scmp.eq.s32.totalorder %s17, 0
      %p132 = por %p130, %p131
      %p133 = scmp.ne.s32.totalorder %s119, %s120
      %p134 = scmp.eq.s32.totalorder %s18, 1
      %p135 = por %p133, %p134
      %p137 = scmp.ne.s32.totalorder %s120, %s136
      %p138 = scmp.eq.s32.totalorder %s18, 0
      %p139 = por %p137, %p138
      %p140 = scmp.le.s32.totalorder 1, %s12
      %p141 = scmp.lt.s32.totalorder %s12, 3
      %p142 = pnand %p140, %p141
      %p143 = pneg %p142
      // Predicated region
      $region9: #{tpu_custom_call.1} parent=5 // pred_check
        _
      $region10: #{tpu_custom_call.1} parent=5 // pred_check_branch
        %145 = sbr.rel (%p142) target = $region12
      $region11: #{tpu_custom_call.1} parent=5 // pred_region
        %s146 = ssub.s32 %s12, 1
      $region12: #{tpu_custom_call.1} parent=5 // pred_fallthru
        _
      %p147 = scmp.lt.s32.totalorder %s12, 2
      // Predicated region
      $region13: #{tpu_custom_call.1} parent=5 // pred_check
        %p148 = pneg %p147
      $region14: #{tpu_custom_call.1} parent=5 // pred_check_branch
        %150 = sbr.rel (%p148) target = $region16
      $region15: #{tpu_custom_call.1} parent=5 // pred_region
        // Predicated region
        $region17: #{tpu_custom_call.1} parent=15 // pred_check
          %p151 = pneg %p46
        $region18: #{tpu_custom_call.1} parent=15 // pred_check_branch
          %153 = sbr.rel (%p151) target = $region20
        $region19: #{tpu_custom_call.1} parent=15 // pred_region
          %s154 = smul.u32 4, %s20
          %p155 = scmp.lt.s32.totalorder %s19, 1
          %s156 = scalar_select %p155, %s19, 1
          %p157 = scmp.lt.s32.totalorder %s154, 3
          %s158 = scalar_select %p157, %s154, 3
          %s159 = smul.addr %s156, 4
          %s160 = sadd.s32 %s158, %s159
          %s161 = smul.addr %s160, 8
          %s162 = scalar_lea.vmem %s0, %s161
          %s163 = smul.u32 4, %s20
        $region20: #{tpu_custom_call.1} parent=15 // pred_fallthru
          _
        // Predicated region
        $region21: #{tpu_custom_call.1} parent=15 // pred_check
          %p164 = pneg %p72
        $region22: #{tpu_custom_call.1} parent=15 // pred_check_branch
          %166 = sbr.rel (%p164) target = $region24
        $region23: #{tpu_custom_call.1} parent=15 // pred_region
          %p167 = scmp.lt.s32.totalorder %s19, 1
          %s168 = scalar_select %p167, %s19, 1
          %s169 = smul.addr %s168, 4
          %s170 = smul.addr %s169, 8
          %s171 = scalar_lea.vmem %s1, %s170
        $region24: #{tpu_custom_call.1} parent=15 // pred_fallthru
          _
        // Predicated region
        $region25: #{tpu_custom_call.1} parent=15 // pred_check
          %p172 = pneg %p98
        $region26: #{tpu_custom_call.1} parent=15 // pred_check_branch
          %174 = sbr.rel (%p172) target = $region28
        $region27: #{tpu_custom_call.1} parent=15 // pred_region
          %p175 = scmp.lt.s32.totalorder %s19, 1
          %s176 = scalar_select %p175, %s19, 1
          %s177 = scalar_lea.vmem %s2, %s176
        $region28: #{tpu_custom_call.1} parent=15 // pred_fallthru
          _
      $region16: #{tpu_custom_call.1} parent=5 // pred_fallthru
        _
      %p178 = scmp.le.s32.totalorder 1, %s12
      %p179 = scmp.lt.s32.totalorder %s12, 3
      %p180 = pnand %p178, %p179
      %p181 = pneg %p180
      // Predicated region
      $region29: #{tpu_custom_call.1} parent=5 // pred_check
        _
      $region30: #{tpu_custom_call.1} parent=5 // pred_check_branch
        %183 = sbr.rel (%p180) target = $region32
      $region31: #{tpu_custom_call.1} parent=5 // pred_region
        %s184 = ssub.s32 %s12, 1
        %s185 = smul.u32 4, %s22
        %p186 = scmp.lt.s32.totalorder %s21, 1
        %s187 = scalar_select %p186, %s21, 1
        %p188 = scmp.lt.s32.totalorder %s185, 3
        %s189 = scalar_select %p188, %s185, 3
        %s190 = smul.addr %s187, 4
        %s191 = sadd.s32 %s189, %s190
        %s192 = smul.addr %s191, 8
        %s193 = scalar_lea.vmem %s0, %s192
        %p194 = pneg %p52
        %p195 = pneg %p49
        %p196 = scmp.lt.s32.totalorder %s21, 1
        %s197 = scalar_select %p196, %s21, 1
        %s198 = smul.addr %s197, 4
        %s199 = smul.addr %s198, 8
        %s200 = scalar_lea.vmem %s1, %s199
        %p201 = pneg %p78
        %p202 = pneg %p75
        %p203 = scmp.lt.s32.totalorder %s21, 1
        %s204 = scalar_select %p203, %s21, 1
        %s205 = scalar_lea.vmem %s2, %s204
        %p206 = pneg %p104
        %p207 = pneg %p101
        %p208 = pneg %p132
        %p209 = pneg %p129
        %s210 = sand.u32 %s119, 1
        %s211 = scalar_lea.sflag [#allocation3], %s210
        %s212 = sand.u32 %s119, 1
        %s213 = smul.addr %s212, 32
        %s214 = scalar_lea.vmem [#allocation2], %s213
        %s215 = smul.u32 4, %s22
        %p216 = scmp.lt.s32.totalorder %s21, 1
        %s217 = scalar_select %p216, %s21, 1
        %p218 = scmp.lt.s32.totalorder %s215, 3
        %s219 = scalar_select %p218, %s215, 3
        %s220 = smul.addr %s217, 4
        %s221 = sadd.s32 %s219, %s220
        %s222 = smul.addr %s221, 8
        %s223 = scalar_lea.vmem %s0, %s222
        %s224 = smul.u32 4, %s22
        %p225 = scmp.lt.s32.totalorder %s21, 1
        %s226 = scalar_select %p225, %s21, 1
        %s227 = smul.addr %s226, 4
        %s228 = smul.addr %s227, 8
        %s229 = scalar_lea.vmem %s1, %s228
        %p230 = scmp.lt.s32.totalorder %s21, 1
        %s231 = scalar_select %p230, %s21, 1
        %s232 = scalar_lea.vmem %s2, %s231
        %s233 = smul.u32 4, %s22
        %v234 = vld [vmem:[%s223] sm:$0xff]
        %v235 = vld [vmem:[%s223 + $0x8] sm:$0xff]
        %v236 = vld [vmem:[%s223 + $0x10] sm:$0xff]
        %v237 = vld [vmem:[%s223 + $0x18] sm:$0xff]
        %v238 = vld [vmem:[%s229] sm:$0xff]
        %v239 = vld [vmem:[%s229 + $0x8] sm:$0xff]
        %v240 = vld [vmem:[%s229 + $0x10] sm:$0xff]
        %v241 = vld [vmem:[%s229 + $0x18] sm:$0xff]
        %vm242 = vcmask 23552
        %v244 = vsel %vm242, %v234, 0
        %v247 = vsel %vm242, %v235, 0
        %v250 = vsel %vm242, %v236, 0
        %v253 = vsel %vm242, %v237, 0
        %v256 = vsel %vm242, %v238, 0
        %v259 = vsel %vm242, %v239, 0
        %v262 = vsel %vm242, %v240, 0
        %v265 = vsel %vm242, %v241, 0
        %267 = vmatprep.subr.mxu0 0.0
        %268 = vmatpush1.xpose.msra.mxu0 0.0
        %269 = vmatprep.subr.mxu0 0.0
        %270 = vmatpush1.xpose.msra.mxu0 0.0
        %271 = vmatprep.subr.mxu0 0.0
        %272 = vmatpush1.xpose.msra.mxu0 0.0
        %273 = vmatprep.subr.mxu0 0.0
        %274 = vmatpush1.xpose.msra.mxu0 0.0
        %275 = vmatprep.subr.mxu0 0.0
        %276 = vmatpush1.xpose.msra.mxu0 0.0
        %277 = vmatprep.subr.mxu0 0.0
        %278 = vmatpush1.xpose.msra.mxu0 0.0
        %279 = vmatprep.subr.mxu0 0.0
        %280 = vmatpush1.xpose.msra.mxu0 0.0
        %281 = vmatprep.subr.mxu0 0.0
        %282 = vmatpush1.xpose.msra.mxu0 0.0
        %283 = vmatprep.subr.mxu0 0.0
        %284 = vmatpush1.xpose.msra.mxu0 0.0
        %285 = vmatprep.subr.mxu0 0.0
        %286 = vmatpush1.xpose.msra.mxu0 0.0
        %287 = vmatprep.subr.mxu0 0.0
        %288 = vmatpush1.xpose.msra.mxu0 0.0
        %289 = vmatprep.subr.mxu0 0.0
        %290 = vmatpush1.xpose.msra.mxu0 0.0
        %291 = vmatprep.subr.mxu0 0.0
        %292 = vmatpush1.xpose.msra.mxu0 %v265
        %293 = vmatprep.subr.mxu0 0.0
        %294 = vmatpush1.xpose.msra.mxu0 %v262
        %295 = vmatprep.subr.mxu0 0.0
        %296 = vmatpush1.xpose.msra.mxu0 %v259
        %297 = vmatprep.subr.mxu0 0.0
        %298 = vmatpush1.xpose.msra.mxu0 %v256
        %299 = vmatprep.subr.mxu0 0.0
        %300 = vmatpush2.xpose.msra.mxu0 0.0
        %301 = vmatprep.subr.mxu0 0.0
        %302 = vmatpush2.xpose.msra.mxu0 0.0
        %303 = vmatprep.subr.mxu0 0.0
        %304 = vmatpush2.xpose.msra.mxu0 0.0
        %305 = vmatprep.subr.mxu0 0.0
        %306 = vmatpush2.xpose.msra.mxu0 0.0
        %307 = vmatprep.subr.mxu0 0.0
        %308 = vmatpush2.xpose.msra.mxu0 0.0
        %309 = vmatprep.subr.mxu0 0.0
        %310 = vmatpush2.xpose.msra.mxu0 0.0
        %311 = vmatprep.subr.mxu0 0.0
        %312 = vmatpush2.xpose.msra.mxu0 0.0
        %313 = vmatprep.subr.mxu0 0.0
        %314 = vmatpush2.xpose.msra.mxu0 0.0
        %315 = vmatprep.subr.mxu0 0.0
        %316 = vmatpush2.xpose.msra.mxu0 0.0
        %317 = vmatprep.subr.mxu0 0.0
        %318 = vmatpush2.xpose.msra.mxu0 0.0
        %319 = vmatprep.subr.mxu0 0.0
        %320 = vmatpush2.xpose.msra.mxu0 0.0
        %321 = vmatprep.subr.mxu0 0.0
        %322 = vmatpush2.xpose.msra.mxu0 0.0
        %323 = vmatprep.subr.mxu0 0.0
        %324 = vmatpush2.xpose.msra.mxu0 0.0
        %325 = vmatprep.subr.mxu0 0.0
        %326 = vmatpush2.xpose.msra.mxu0 0.0
        %327 = vmatprep.subr.mxu0 0.0
        %328 = vmatpush2.xpose.msra.mxu0 0.0
        %329 = vmatprep.subr.mxu0 0.0
        %330 = vmatpush2.xpose.msra.mxu0 0.0
        %331 = vmatprep.mubr.f32.mxu0 0.0
        %332 = vmatmul.mubr.f32.gmra.mxu0 %v244
        %v333 = vpop.f32.mrf.mxu0
        %v334 = vadd.f32 0.0, %v333
        %v335 = vpop.f32.mrf.mxu0
        %336 = vmatprep.mubr.f32.mxu0 0.0
        %337 = vmatmul.mubr.f32.gmra.mxu0 %v247
        %v338 = vpop.f32.mrf.mxu0
        %v339 = vadd.f32 0.0, %v338
        %v340 = vpop.f32.mrf.mxu0
        %341 = vmatprep.mubr.f32.mxu0 0.0
        %342 = vmatmul.mubr.f32.gmra.mxu0 %v250
        %v343 = vpop.f32.mrf.mxu0
        %v344 = vadd.f32 0.0, %v343
        %v345 = vpop.f32.mrf.mxu0
        %346 = vmatprep.mubr.f32.mxu0 0.0
        %347 = vmatmul.mubr.f32.gmra.mxu0 %v253
        %v348 = vpop.f32.mrf.mxu0
        %v349 = vadd.f32 0.0, %v348
        %v350 = vpop.f32.mrf.mxu0
        %351 = vdwg.mxu0
        %v352 = vmul.f32 %v334, 2.0
        %v353 = vmul.f32 %v339, 2.0
        %v354 = vmul.f32 %v344, 2.0
        %v355 = vmul.f32 %v349, 2.0
        %v356 = vld [vmem:[%s232] sm:$0x1]
        %v358 = vlaneseq
        %v359 = vshrl.u32 %v358, 7
        %v360 = vsub.s32 0, %v359
        %v361 = vrot.slane %v356, %v360
        %v363 = vsub.f32 %v352, %v361
        %v364 = vsub.f32 %v353, %v361
        %v365 = vsub.f32 %v354, %v361
        %v366 = vsub.f32 %v355, %v361
        %vm367 = vcmask 261120
        %368 = vst.msk [vmem:[%s214] sm:$0xff] %vm367, %v363
        %369 = vst.msk [vmem:[%s214 + $0x8] sm:$0xff] %vm367, %v364
        %370 = vst.msk [vmem:[%s214 + $0x10] sm:$0xff] %vm367, %v365
        %371 = vst.msk [vmem:[%s214 + $0x18] sm:$0xff] %vm367, %v366
        %s372 = sand.u32 %s119, 1
        %s373 = scalar_lea.sflag [#allocation3], %s372
        %s374 = sand.u32 %s119, 1
        %s375 = smul.addr %s374, 32
        %s376 = scalar_lea.vmem [#allocation2], %s375
        // Predicated region
        $region33: #{tpu_custom_call.1} parent=31 // pred_check
          %p377 = pneg %p129
        $region34: #{tpu_custom_call.1} parent=31 // pred_check_branch
          %379 = sbr.rel (%p377) target = $region36
        $region35: #{tpu_custom_call.1} parent=31 // pred_region
          %s380 = smul.u32 4, %s22
          %s382 = ssub.s32 512, 512
          %383 = vsyncadd %s373, %s382
          %s384 = smul.addr %s21, 4
          %s385 = sadd.s32 %s380, %s384
          %s386 = smul.addr %s385, 128
          %s387 = scalar_lea.hbm %s3, %s386
          %s388 = sshll.u32 %s376, 4
          %s389 = int_to_ptr.vmem [resolvable:$true] %s388
          %394 = dma.vmem_to_hbm [thread:$0]  %s389, 512, %s387, %s373, 128, 128, 8
        $region36: #{tpu_custom_call.1} parent=31 // pred_fallthru
          _
      $region32: #{tpu_custom_call.1} parent=5 // pred_fallthru
        _
      %p395 = scmp.le.s32.totalorder 2, %s12
      // Predicated region
      $region37: #{tpu_custom_call.1} parent=5 // pred_check
        %p396 = pneg %p395
      $region38: #{tpu_custom_call.1} parent=5 // pred_check_branch
        %398 = sbr.rel (%p396) target = $region40
      $region39: #{tpu_custom_call.1} parent=5 // pred_region
        %s399 = ssub.s32 %s12, 2
        // Predicated region
        $region41: #{tpu_custom_call.1} parent=39 // pred_check
          %p400 = pneg %p135
        $region42: #{tpu_custom_call.1} parent=39 // pred_check_branch
          %402 = sbr.rel (%p400) target = $region44
        $region43: #{tpu_custom_call.1} parent=39 // pred_region
          %s403 = sand.u32 %s120, 1
          %s404 = scalar_lea.sflag [#allocation3], %s403
          %s405 = sand.u32 %s120, 1
          %s406 = smul.addr %s405, 32
          %s407 = scalar_lea.vmem [#allocation2], %s406
          %408 = dma.done %s404, 512
        $region44: #{tpu_custom_call.1} parent=39 // pred_fallthru
          _
      $region40: #{tpu_custom_call.1} parent=5 // pred_fallthru
        _
    $region6: #{tpu_custom_call.1} parent=1 // loop_footer
      %s16 = sadd.s32 1, %s12
    $region7: #{tpu_custom_call.1} parent=1 // loop_footer_branch
      %11 = sbr.rel target = $region3
    $region8: #{tpu_custom_call.1} parent=1 // loop_exit
      _
    %409 = vsyncpa [#allocation3], 1
    %s410 = scalar_lea.sflag [#allocation3], 1
    %411 = vsyncpa %s410, 1

</llo_original>
